<compile_context>
chip_gen: v7x
topology: tpu7x:2x2x1
jax: 0.10.0
libtpu: 0.0.40
codegen_flags: <defaults>
</compile_context>

<pallas_src>
import functools

import jax
import jax.numpy as jnp
from jax.experimental import pallas as pl
from jax.experimental.pallas import tpu as pltpu


def _round_up(x, m):
    return (x + m - 1) // m * m


def _cdiv(a, b):
    return (a + b - 1) // b


# ---------------------------------------------------------------------------
# Glue: deformable-conv-v2 bilinear sampling -> im2col columns (plain JAX).
# Semantics follow torchvision.ops.deform_conv2d (zero padding outside the
# image, per-corner validity, interleaved (dy, dx) offsets, optional mask).
# Columns are emitted in bf16 so the single HBM materialization is half-width.
# ---------------------------------------------------------------------------
def _deform_im2col(x, offset, mask, kh, kw, stride, padding, dilation,
                   offset_groups):
    N, C, H, W = x.shape
    sh, sw = stride
    ph, pw = padding
    dh, dw = dilation
    Ho = (H + 2 * ph - dh * (kh - 1) - 1) // sh + 1
    Wo = (W + 2 * pw - dw * (kw - 1) - 1) // sw + 1
    K = kh * kw
    OG = offset_groups
    Cg = C // OG

    off = offset.reshape(N, OG, K, 2, Ho, Wo)
    dy = off[:, :, :, 0]                                   # (N, OG, K, Ho, Wo)
    dx = off[:, :, :, 1]
    if mask is None:
        m = jnp.ones((N, OG, K, Ho, Wo), dtype=x.dtype)
    else:
        m = mask.reshape(N, OG, K, Ho, Wo)

    ki = jnp.arange(K) // kw
    kj = jnp.arange(K) % kw
    base_y = (jnp.arange(Ho) * sh - ph)[None, :] + (ki * dh)[:, None]  # (K, Ho)
    base_x = (jnp.arange(Wo) * sw - pw)[None, :] + (kj * dw)[:, None]  # (K, Wo)

    py = base_y[None, None, :, :, None].astype(x.dtype) + dy           # (N,OG,K,Ho,Wo)
    px = base_x[None, None, :, None, :].astype(x.dtype) + dx

    valid = (py > -1.0) & (py < H) & (px > -1.0) & (px < W)

    y0f = jnp.floor(py)
    x0f = jnp.floor(px)
    ly = py - y0f
    lx = px - x0f
    hy = 1.0 - ly
    hx = 1.0 - lx

    y0 = y0f.astype(jnp.int32)
    x0 = x0f.astype(jnp.int32)
    y1 = y0 + 1
    x1 = x0 + 1

    c00 = (y0 >= 0) & (x0 >= 0)
    c01 = (y0 >= 0) & (x1 <= W - 1)
    c10 = (y1 <= H - 1) & (x0 >= 0)
    c11 = (y1 <= H - 1) & (x1 <= W - 1)

    y0c = jnp.clip(y0, 0, H - 1)
    y1c = jnp.clip(y1, 0, H - 1)
    x0c = jnp.clip(x0, 0, W - 1)
    x1c = jnp.clip(x1, 0, W - 1)

    x_g = x.reshape(N, OG, Cg, H * W)

    def gather2(xf, ii):                     # xf (Cg, HW), ii (K, Ho, Wo)
        return jnp.take(xf, ii.reshape(-1), axis=1).reshape(
            (xf.shape[0],) + ii.shape)

    gather = jax.vmap(jax.vmap(gather2))     # over N, OG

    # Corner-fused accumulation (avoids materializing 4 full corner tensors).
    val = jnp.zeros((N, OG, Cg, K, Ho, Wo), dtype=x.dtype)
    for yc, xc, cv, wc in (
        (y0c, x0c, c00, hy * hx),
        (y0c, x1c, c01, hy * lx),
        (y1c, x0c, c10, ly * hx),
        (y1c, x1c, c11, ly * lx),
    ):
        v = gather(x_g, yc * W + xc)                       # (N,OG,Cg,K,Ho,Wo)
        w = jnp.where(cv, wc, 0.0)[:, :, None]             # (N,OG,1,K,Ho,Wo)
        val = val + w * v

    val = jnp.where(valid[:, :, None], val, 0.0)
    # Cast at the end of the fusion: the single HBM write of cols is bf16.
    val = (val * m[:, :, None]).astype(jnp.bfloat16)

    # (N, OG, Cg, K, Ho, Wo) -> (N, C*K, Ho*Wo); channel order og*Cg+cg matches
    # deform_conv2d's contiguous channel split and c*K+k matches
    # weight.reshape(C_out, C_in*KH*KW).
    cols = val.reshape(N, C, K, Ho * Wo).reshape(N, C * K, Ho * Wo)
    return cols, Ho, Wo


# ---------------------------------------------------------------------------
# Pallas kernels.
# ---------------------------------------------------------------------------
def _matmul_bias_relu_kernel_fullk(w_ref, b_ref, cols_ref, out_ref):
    # Collapsed-K path: one MXU matmul per output tile; weight/bias resident.
    acc = jnp.dot(w_ref[...], cols_ref[0], preferred_element_type=jnp.float32)
    out_ref[0] = jnp.maximum(acc + b_ref[...], 0.0).astype(out_ref.dtype)


def _matmul_bias_relu_kernel_ktiled(w_ref, b_ref, cols_ref, out_ref, acc_ref,
                                    *, tk, w_resident):
    # K-tiled fallback for very large contractions.
    k = pl.program_id(2)

    @pl.when(k == 0)
    def _():
        # Bias-initialize the accumulator: saves a zero-init store and the
        # epilogue add on the critical path of the last K step.
        acc_ref[...] = jnp.broadcast_to(b_ref[...], acc_ref.shape)

    if w_resident:
        start = pl.multiple_of(k * tk, 128)
        w_tile = w_ref[:, pl.ds(start, tk)]
    else:
        w_tile = w_ref[...]
    acc_ref[...] += jnp.dot(w_tile, cols_ref[0],
                            preferred_element_type=jnp.float32)

    @pl.when(k == pl.num_programs(2) - 1)
    def _():
        out_ref[0] = jnp.maximum(acc_ref[...], 0.0).astype(out_ref.dtype)


# ---------------------------------------------------------------------------
# Wrapper.
# ---------------------------------------------------------------------------
@functools.partial(
    jax.jit, static_argnames=("stride", "padding", "dilation", "offset_groups"))
def deform_conv_relu2d(x, offset, weight, bias, mask=None, *,
                       stride=(1, 1), padding=(0, 0), dilation=(1, 1),
                       offset_groups=1):
    """Forward of DeformConvReLU2d: deform_conv2d(input, offset, mask) -> ReLU."""
    N, C, _, _ = x.shape
    C_out, C_in_w, kh, kw = weight.shape
    if C_in_w != C:
        # TODO(synk): grouped deformable conv (weight groups != 1) not implemented.
        raise NotImplementedError("deform_conv_relu2d supports groups=1 only")

    cols, Ho, Wo = _deform_im2col(x, offset, mask, kh, kw, stride, padding,
                                  dilation, offset_groups)
    K_total = C * kh * kw
    P = Ho * Wo
    out_isz = jnp.dtype(x.dtype).itemsize

    # ---- Tile sizing -------------------------------------------------------
    # C_out only needs sublane (8/16) alignment — do NOT pad to 128.
    COP = _round_up(C_out, 16)

    # Adaptive output tile: up to 1024 lanes, 128-aligned, minimal P padding.
    TP_MAX = 1024
    TP = _round_up(_cdiv(P, _cdiv(P, TP_MAX)), 128)
    P_pad = _round_up(P, TP)

    K_pad = _round_up(K_total, 128)

    def _workset(weight_k, cols_k, with_acc):
        b = (2 * COP * weight_k * 2        # weight (bf16), worst-case 2 bufs
             + 2 * COP * 1 * 4             # bias (f32)
             + 2 * cols_k * TP * 2         # cols block (bf16), double-buffered
             + 2 * COP * TP * out_isz)     # output block, double-buffered
        if with_acc:
            b += COP * TP * 4              # f32 accumulator scratch
        return b

    VMEM_BUDGET = 24 << 20                 # conservative: fits v7x's 64 MiB TC
    collapse_k = _workset(K_pad, K_pad, False) <= VMEM_BUDGET

    if collapse_k:
        TK = K_pad
        w_resident = True
        ws = _workset(K_pad, K_pad, False)
    else:
        TK = 512
        K_pad = _round_up(K_total, TK)
        w_resident = _workset(K_pad, TK, True) <= VMEM_BUDGET
        ws = _workset(K_pad if w_resident else TK, TK, True)

    # Size the VMEM limit from the real working set (with margin) instead of
    # claiming the whole physical VMEM; cap below v7x's 64 MiB.
    vmem_limit = int(min(max(2 * ws + (4 << 20), 16 << 20), 56 << 20))

    # ---- Pad / pack matmul operands ----------------------------------------
    # cols is already bf16 at source; pad only if needed (single extra bf16
    # copy at most, zero copies when shapes are already aligned).
    if K_pad != K_total or P_pad != P:
        cols = jnp.pad(cols, ((0, 0), (0, K_pad - K_total), (0, P_pad - P)))
    w_p = jnp.pad(weight.reshape(C_out, K_total).astype(jnp.bfloat16),
                  ((0, COP - C_out), (0, K_pad - K_total)))
    b_p = jnp.pad(bias.reshape(C_out, 1).astype(jnp.float32),
                  ((0, COP - C_out), (0, 0)))

    if collapse_k:
        grid = (N, P_pad // TP)
        out_flat = pl.pallas_call(
            _matmul_bias_relu_kernel_fullk,
            out_shape=jax.ShapeDtypeStruct((N, COP, P_pad), x.dtype),
            grid_spec=pltpu.PrefetchScalarGridSpec(
                num_scalar_prefetch=0,
                grid=grid,
                in_specs=[
                    pl.BlockSpec((COP, K_pad), lambda n, p: (0, 0)),   # weight (resident)
                    pl.BlockSpec((COP, 1), lambda n, p: (0, 0)),       # bias (resident)
                    pl.BlockSpec((1, K_pad, TP), lambda n, p: (n, 0, p)),  # cols
                ],
                out_specs=pl.BlockSpec((1, COP, TP), lambda n, p: (n, 0, p)),
            ),
            compiler_params=pltpu.CompilerParams(
                dimension_semantics=("parallel", "parallel"),
                vmem_limit_bytes=vmem_limit,
            ),
        )(w_p, b_p, cols)
    else:
        grid = (N, P_pad // TP, K_pad // TK)
        if w_resident:
            w_spec = pl.BlockSpec((COP, K_pad), lambda n, p, k: (0, 0))
        else:
            w_spec = pl.BlockSpec((COP, TK), lambda n, p, k: (0, k))
        out_flat = pl.pallas_call(
            functools.partial(_matmul_bias_relu_kernel_ktiled,
                              tk=TK, w_resident=w_resident),
            out_shape=jax.ShapeDtypeStruct((N, COP, P_pad), x.dtype),
            grid_spec=pltpu.PrefetchScalarGridSpec(
                num_scalar_prefetch=0,
                grid=grid,
                in_specs=[
                    w_spec,                                             # weight
                    pl.BlockSpec((COP, 1), lambda n, p, k: (0, 0)),     # bias
                    pl.BlockSpec((1, TK, TP), lambda n, p, k: (n, k, p)),  # cols
                ],
                out_specs=pl.BlockSpec((1, COP, TP), lambda n, p, k: (n, 0, p)),
                scratch_shapes=[pltpu.VMEM((COP, TP), jnp.float32)],
            ),
            compiler_params=pltpu.CompilerParams(
                dimension_semantics=("parallel", "parallel", "arbitrary"),
                vmem_limit_bytes=vmem_limit,
            ),
        )(w_p, b_p, cols)

    # Strip C_out / spatial padding and restore NCHW.
    return out_flat[:, :C_out, :P].reshape(N, C_out, Ho, Wo)


if __name__ == "__main__":
    # Small shapes consistent with the module (groups=1, offset_groups=2).
    N, C_in, H, W = 2, 4, 16, 16
    C_out, kh, kw = 8, 3, 3
    stride, padding, dilation = (1, 1), (1, 1), (1, 1)
    offset_groups = 2
    Ho = (H + 2 * padding[0] - dilation[0] * (kh - 1) - 1) // stride[0] + 1
    Wo = (W + 2 * padding[1] - dilation[1] * (kw - 1) - 1) // stride[1] + 1

    key = jax.random.PRNGKey(0)
    k_x, k_off, k_msk, k_w, k_b = jax.random.split(key, 5)

    x = jax.random.normal(k_x, (N, C_in, H, W), dtype=jnp.float32)
    offset = 0.5 * jax.random.normal(
        k_off, (N, 2 * offset_groups * kh * kw, Ho, Wo), dtype=jnp.float32)
    mask = jax.nn.sigmoid(jax.random.normal(
        k_msk, (N, offset_groups * kh * kw, Ho, Wo), dtype=jnp.float32))

    # DeformConv2d params: weight (C_out, C_in/groups, kh, kw), bias (C_out,)
    weight = 0.1 * jax.random.normal(k_w, (C_out, C_in, kh, kw), dtype=jnp.float32)
    bias = 0.1 * jax.random.normal(k_b, (C_out,), dtype=jnp.float32)

    out = deform_conv_relu2d(x, offset, weight, bias, mask,
                             stride=stride, padding=padding,
                             dilation=dilation, offset_groups=offset_groups)
    out = jax.block_until_ready(out)

    # Reference for the Pallas hot path: identical math (bf16 cols/weights,
    # f32 accumulation, f32 bias + ReLU) computed with plain JAX.
    cols_ref, _, _ = _deform_im2col(x, offset, mask, kh, kw, stride, padding,
                                    dilation, offset_groups)   # bf16 columns
    w_mat = weight.reshape(C_out, C_in * kh * kw)
    ref = jnp.maximum(
        jnp.einsum("ok,nkp->nop",
                   w_mat.astype(jnp.bfloat16).astype(jnp.float32),
                   cols_ref.astype(jnp.float32))
        + bias[None, :, None], 0.0).reshape(N, C_out, Ho, Wo)

    assert out.shape == (N, C_out, Ho, Wo)
    assert jnp.allclose(out, ref, atol=1e-4, rtol=1e-4), \
        float(jnp.max(jnp.abs(out - ref)))

    print("KERNEL_OK")
</pallas_src>

<mosaic_0001>
module attributes {stable_mosaic.version = 11 : i64} {
  func.func @_matmul_bias_relu_kernel_fullk(%arg0: i32, %arg1: i32, %arg2: memref<16x128xbf16, #tpu.memory_space<vmem>>, %arg3: memref<16x1xf32, #tpu.memory_space<vmem>>, %arg4: memref<1x128x256xbf16, #tpu.memory_space<vmem>>, %arg5: memref<1x16x256xf32, #tpu.memory_space<vmem>>) attributes {dimension_semantics = [#tpu.dimension_semantics<parallel>, #tpu.dimension_semantics<parallel>], iteration_bounds = array<i64: 2, 1>, scalar_prefetch = 0 : i64, scratch_operands = 0 : i64, tpu.core_type = #tpu.core_type<tc>, window_params = [{pipeline_mode = #tpu.pipeline_mode<synchronous>, transform_indices = @transform_0, window_bounds = array<i64: 16, 128>}, {pipeline_mode = #tpu.pipeline_mode<synchronous>, transform_indices = @transform_1, window_bounds = array<i64: 16, 1>}, {transform_indices = @transform_2, window_bounds = array<i64: 1, 128, 256>}, {transform_indices = @transform_3, window_bounds = array<i64: 1, 16, 256>}]} {
    %c0 = arith.constant 0 : index
    %c0_0 = arith.constant 0 : index
    %0 = vector.load %arg2[%c0, %c0_0] : memref<16x128xbf16, #tpu.memory_space<vmem>>, vector<16x128xbf16>
    %c0_1 = arith.constant 0 : index
    %c0_2 = arith.constant 0 : index
    %c0_3 = arith.constant 0 : index
    %1 = vector.load %arg4[%c0_1, %c0_2, %c0_3] : memref<1x128x256xbf16, #tpu.memory_space<vmem>>, vector<1x128x256xbf16>
    %2 = vector.shape_cast %1 : vector<1x128x256xbf16> to vector<128x256xbf16>
    %cst = arith.constant dense<0.000000e+00> : vector<16x256xf32>
    %3 = tpu.matmul %0, %2, %cst {dimension_numbers = #tpu.dot_dimension_numbers<[1], [0], [0], [1], [0, 0, 1, 1], [], []>} : vector<16x128xbf16>, vector<128x256xbf16>, vector<16x256xf32> -> vector<16x256xf32>
    %c0_4 = arith.constant 0 : index
    %c0_5 = arith.constant 0 : index
    %4 = vector.load %arg3[%c0_4, %c0_5] : memref<16x1xf32, #tpu.memory_space<vmem>>, vector<16x1xf32>
    %5 = vector.broadcast %4 : vector<16x1xf32> to vector<16x256xf32>
    %6 = arith.addf %3, %5 : vector<16x256xf32>
    %cst_6 = arith.constant 0.000000e+00 : f32
    %7 = vector.broadcast %cst_6 : f32 to vector<16x256xf32>
    %8 = arith.maximumf %6, %7 : vector<16x256xf32>
    %c0_7 = arith.constant 0 : index
    %c0_8 = arith.constant 0 : index
    %c0_9 = arith.constant 0 : index
    %9 = vector.load %arg5[%c0_7, %c0_8, %c0_9] : memref<1x16x256xf32, #tpu.memory_space<vmem>>, vector<1x16x256xf32>
    %10 = vector.shape_cast %9 : vector<1x16x256xf32> to vector<16x256xf32>
    %11 = vector.shape_cast %8 : vector<16x256xf32> to vector<1x16x256xf32>
    tpu.vector_store %arg5[%c0_7, %c0_8, %c0_9], %11 {strides = array<i32>} : memref<1x16x256xf32, #tpu.memory_space<vmem>>, vector<1x16x256xf32>,
    return
  }
  func.func @transform_0(%arg0: i32, %arg1: i32) -> (i32, i32) {
    %c0_i32 = arith.constant 0 : i32
    %c0_i32_0 = arith.constant 0 : i32
    %c0_i32_1 = arith.constant 0 : i32
    return %c0_i32, %c0_i32_0 : i32, i32
  }
  func.func @transform_1(%arg0: i32, %arg1: i32) -> (i32, i32) {
    %c0_i32 = arith.constant 0 : i32
    %c0_i32_0 = arith.constant 0 : i32
    %c0_i32_1 = arith.constant 0 : i32
    return %c0_i32, %c0_i32_0 : i32, i32
  }
  func.func @transform_2(%arg0: i32, %arg1: i32) -> (i32, i32, i32) {
    %c0_i32 = arith.constant 0 : i32
    %c0_i32_0 = arith.constant 0 : i32
    return %arg0, %c0_i32, %arg1 : i32, i32, i32
  }
  func.func @transform_3(%arg0: i32, %arg1: i32) -> (i32, i32, i32) {
    %c0_i32 = arith.constant 0 : i32
    %c0_i32_0 = arith.constant 0 : i32
    return %arg0, %c0_i32, %arg1 : i32, i32, i32
  }
}

</mosaic_0001>

<llo_original>
// kernel: deform_conv_relu2d.1
$region0: #{deform_conv_relu2d.1}
  #allocation0 [shape = 'u32[]', space=smem, size = 0x4, offset = 0x4, fixed_abs, tag = 'smem constant byte address 0x4 - core index']
  #allocation1 [shape = 'u32[144,128]{1,0:T(1,128)}', space=vmem, size = 0x12000, scoped, tag = 'internal scratch']
  %s0 = inlined_call_operand.vmem [shape: bf16[16,128], index: 0, kind: input, shape index: {}]
  %s1 = inlined_call_operand.vmem [shape: f32[16,1], index: 1, kind: input, shape index: {}]
  %s2 = inlined_call_operand.vmem [shape: bf16[2,128,256], index: 2, kind: input, shape index: {}]
  %s3 = inlined_call_operand.vmem [shape: f32[2,16,256], index: 3, kind: output, shape index: {}]
  %s4 = sld [smem:[#allocation0]]
  $region45: #{deform_conv_relu2d.1} parent=0
    _
  %s6 = ssub.s32 1, %s4
  %s7 = scalar_select 0, %s6, %s4
  loop: start=0, step=1, limit=4
  $region2: #{deform_conv_relu2d.1} parent=0 // loop_pre_header
    _
  $region3: #{deform_conv_relu2d.1} parent=0 // loop_header
    %s9 = sphi 0, %s13
    %p10 = scmp.ge.s32.totalorder %s9, 4
    %s16 = sphi 0, %s28
    %s17 = sphi 0, %s24
    %s18 = sphi 0, %s16
    %s19 = sphi 0, %s17
    %s20 = sphi 0, %s18
    %s21 = sphi 0, %s19
    %s29 = sphi 0, %s29
    %s31 = sphi 0, %s29
    %s32 = sphi 0, %s31
    %s46 = sphi 0, %s32
    %s50 = sphi 0, %s50
    %s52 = sphi 0, %s50
    %s53 = sphi 0, %s52
    %s67 = sphi 0, %s53
    %s75 = sphi 0, %s77
    %s78 = sphi 0, %s75
    %s79 = sphi 0, %s78
    %s95 = sphi 0, %s79
    %s103 = sphi 0, %s105
    %s106 = sphi 0, %s103
    %s107 = sphi 0, %s106
    %s123 = sphi 0, %s107
  $region4: #{deform_conv_relu2d.1} parent=0 // loop_header_branch
    %12 = sbr.rel (%p10) target = $region8
  $region5: #{deform_conv_relu2d.1} parent=0 // loop_body
    %s14 = ssub.s32 %s9, 1
    %s15 = ssub.s32 %s9, 2
    %s22 = sadd.s32 1, %s17
    %p23 = scmp.ge.s32.totalorder %s22, 1
    %s24 = scalar_select %p23, 0, %s22
    %s25 = sadd.s32 1, %s16
    %s26 = scalar_select %p23, %s25, %s16
    %p27 = scmp.ge.s32.totalorder %s26, 2
    %s28 = scalar_select %p27, 0, %s26
    %s30 = sadd.s32 %s29, 1
    %p33 = scmp.eq.s32.totalorder %s9, 1
    %p34 = scmp.ne.s32.totalorder %s29, %s31
    %p35 = scmp.eq.s32.totalorder %s9, 0
    %p36 = por %p34, %p35
    %p37 = scmp.ne.s32.totalorder %s29, %s31
    %p38 = scmp.eq.s32.totalorder %s14, 1
    %p39 = por %p37, %p38
    %p40 = scmp.ne.s32.totalorder %s31, %s32
    %p41 = scmp.eq.s32.totalorder %s14, 0
    %p42 = por %p40, %p41
    %p43 = scmp.ne.s32.totalorder %s31, %s32
    %p44 = scmp.eq.s32.totalorder %s15, 1
    %p45 = por %p43, %p44
    %p47 = scmp.ne.s32.totalorder %s32, %s46
    %p48 = scmp.eq.s32.totalorder %s15, 0
    %p49 = por %p47, %p48
    %s51 = sadd.s32 %s50, 1
    %p54 = scmp.eq.s32.totalorder %s9, 1
    %p55 = scmp.ne.s32.totalorder %s50, %s52
    %p56 = scmp.eq.s32.totalorder %s9, 0
    %p57 = por %p55, %p56
    %p58 = scmp.ne.s32.totalorder %s50, %s52
    %p59 = scmp.eq.s32.totalorder %s14, 1
    %p60 = por %p58, %p59
    %p61 = scmp.ne.s32.totalorder %s52, %s53
    %p62 = scmp.eq.s32.totalorder %s14, 0
    %p63 = por %p61, %p62
    %p64 = scmp.ne.s32.totalorder %s52, %s53
    %p65 = scmp.eq.s32.totalorder %s15, 1
    %p66 = por %p64, %p65
    %p68 = scmp.ne.s32.totalorder %s53, %s67
    %p69 = scmp.eq.s32.totalorder %s15, 0
    %p70 = por %p68, %p69
    %s71 = ssub.s32 %s16, %s28
    %s72 = ssub.s32 %s17, %s24
    %s73 = sor.u32 %s71, %s72
    %p74 = scmp.eq.s32.totalorder %s73, 0
    %s76 = sadd.s32 %s75, 1
    %s77 = scalar_select %p74, %s75, %s76
    %p80 = pneg %p74
    %p81 = scmp.eq.s32.totalorder %s9, 1
    %p82 = por %p80, %p81
    %p83 = scmp.ne.s32.totalorder %s75, %s78
    %p84 = scmp.eq.s32.totalorder %s9, 0
    %p85 = por %p83, %p84
    %p86 = scmp.ne.s32.totalorder %s75, %s78
    %p87 = scmp.eq.s32.totalorder %s14, 1
    %p88 = por %p86, %p87
    %p89 = scmp.ne.s32.totalorder %s78, %s79
    %p90 = scmp.eq.s32.totalorder %s14, 0
    %p91 = por %p89, %p90
    %p92 = scmp.ne.s32.totalorder %s78, %s79
    %p93 = scmp.eq.s32.totalorder %s15, 1
    %p94 = por %p92, %p93
    %p96 = scmp.ne.s32.totalorder %s79, %s95
    %p97 = scmp.eq.s32.totalorder %s15, 0
    %p98 = por %p96, %p97
    %s99 = ssub.s32 %s16, %s28
    %s100 = ssub.s32 %s17, %s24
    %s101 = sor.u32 %s99, %s100
    %p102 = scmp.eq.s32.totalorder %s101, 0
    %s104 = sadd.s32 %s103, 1
    %s105 = scalar_select %p102, %s103, %s104
    %p108 = pneg %p102
    %p109 = scmp.eq.s32.totalorder %s9, 1
    %p110 = por %p108, %p109
    %p111 = scmp.ne.s32.totalorder %s103, %s106
    %p112 = scmp.eq.s32.totalorder %s9, 0
    %p113 = por %p111, %p112
    %p114 = scmp.ne.s32.totalorder %s103, %s106
    %p115 = scmp.eq.s32.totalorder %s14, 1
    %p116 = por %p114, %p115
    %p117 = scmp.ne.s32.totalorder %s106, %s107
    %p118 = scmp.eq.s32.totalorder %s14, 0
    %p119 = por %p117, %p118
    %p120 = scmp.ne.s32.totalorder %s106, %s107
    %p121 = scmp.eq.s32.totalorder %s15, 1
    %p122 = por %p120, %p121
    %p124 = scmp.ne.s32.totalorder %s107, %s123
    %p125 = scmp.eq.s32.totalorder %s15, 0
    %p126 = por %p124, %p125
    %p127 = scmp.le.s32.totalorder 1, %s9
    %p128 = scmp.lt.s32.totalorder %s9, 3
    %p129 = pnand %p127, %p128
    %p130 = pneg %p129
    // Predicated region
    $region9: #{deform_conv_relu2d.1} parent=5 // pred_check
      _
    $region10: #{deform_conv_relu2d.1} parent=5 // pred_check_branch
      %132 = sbr.rel (%p129) target = $region12
    $region11: #{deform_conv_relu2d.1} parent=5 // pred_region
      %s133 = ssub.s32 %s9, 1
      // Predicated region
      $region13: #{deform_conv_relu2d.1} parent=11 // pred_check
        %p134 = pneg %p42
      $region14: #{deform_conv_relu2d.1} parent=11 // pred_check_branch
        %136 = sbr.rel (%p134) target = $region16
      $region15: #{deform_conv_relu2d.1} parent=11 // pred_region
        _
      $region16: #{deform_conv_relu2d.1} parent=11 // pred_fallthru
        _
      // Predicated region
      $region17: #{deform_conv_relu2d.1} parent=11 // pred_check
        %p137 = pneg %p63
      $region18: #{deform_conv_relu2d.1} parent=11 // pred_check_branch
        %139 = sbr.rel (%p137) target = $region20
      $region19: #{deform_conv_relu2d.1} parent=11 // pred_region
        _
      $region20: #{deform_conv_relu2d.1} parent=11 // pred_fallthru
        _
    $region12: #{deform_conv_relu2d.1} parent=5 // pred_fallthru
      _
    %p140 = scmp.lt.s32.totalorder %s9, 2
    // Predicated region
    $region21: #{deform_conv_relu2d.1} parent=5 // pred_check
      %p141 = pneg %p140
    $region22: #{deform_conv_relu2d.1} parent=5 // pred_check_branch
      %143 = sbr.rel (%p141) target = $region24
    $region23: #{deform_conv_relu2d.1} parent=5 // pred_region
      // Predicated region
      $region25: #{deform_conv_relu2d.1} parent=23 // pred_check
        %p144 = pneg %p85
      $region26: #{deform_conv_relu2d.1} parent=23 // pred_check_branch
        %146 = sbr.rel (%p144) target = $region28
      $region27: #{deform_conv_relu2d.1} parent=23 // pred_region
        %s147 = smul.u32 2, %s17
        %p148 = scmp.lt.s32.totalorder %s16, 1
        %s149 = scalar_select %p148, %s16, 1
        %p150 = scmp.lt.s32.totalorder %s147, 1
        %s151 = scalar_select %p150, %s147, 1
        %s152 = smul.addr %s149, 32
        %s153 = sadd.s32 %s151, %s152
        %s154 = smul.addr %s153, 4
        %s155 = scalar_lea.vmem %s2, %s154
        %s156 = smul.u32 2, %s17
      $region28: #{deform_conv_relu2d.1} parent=23 // pred_fallthru
        _
    $region24: #{deform_conv_relu2d.1} parent=5 // pred_fallthru
      _
    %p157 = scmp.le.s32.totalorder 1, %s9
    %p158 = scmp.lt.s32.totalorder %s9, 3
    %p159 = pnand %p157, %p158
    %p160 = pneg %p159
    // Predicated region
    $region29: #{deform_conv_relu2d.1} parent=5 // pred_check
      _
    $region30: #{deform_conv_relu2d.1} parent=5 // pred_check_branch
      %162 = sbr.rel (%p159) target = $region32
    $region31: #{deform_conv_relu2d.1} parent=5 // pred_region
      %s163 = ssub.s32 %s9, 1
      %p164 = pneg %p42
      %p165 = pneg %p39
      %p166 = pneg %p63
      %p167 = pneg %p60
      %s168 = smul.u32 2, %s19
      %p169 = scmp.lt.s32.totalorder %s18, 1
      %s170 = scalar_select %p169, %s18, 1
      %p171 = scmp.lt.s32.totalorder %s168, 1
      %s172 = scalar_select %p171, %s168, 1
      %s173 = smul.addr %s170, 32
      %s174 = sadd.s32 %s172, %s173
      %s175 = smul.addr %s174, 4
      %s176 = scalar_lea.vmem %s2, %s175
      %p177 = pneg %p91
      %p178 = pneg %p88
      %p179 = pneg %p119
      %p180 = pneg %p116
      %s181 = smul.u32 2, %s19
      %p182 = scmp.lt.s32.totalorder %s18, 1
      %s183 = scalar_select %p182, %s18, 1
      %p184 = scmp.lt.s32.totalorder %s181, 1
      %s185 = scalar_select %p184, %s181, 1
      %s186 = smul.addr %s183, 4
      %s187 = sadd.s32 %s185, %s186
      %s188 = smul.addr %s187, 8
      %s189 = scalar_lea.vmem %s3, %s188
      %s190 = smul.u32 2, %s19
      %p191 = scmp.lt.s32.totalorder %s18, 1
      %s192 = scalar_select %p191, %s18, 1
      %p193 = scmp.lt.s32.totalorder %s190, 1
      %s194 = scalar_select %p193, %s190, 1
      %s195 = smul.addr %s192, 32
      %s196 = sadd.s32 %s194, %s195
      %s197 = smul.addr %s196, 4
      %s198 = scalar_lea.vmem %s2, %s197
      %s199 = smul.u32 2, %s19
      %s200 = smul.u32 2, %s19
      %p201 = scmp.lt.s32.totalorder %s18, 1
      %s202 = scalar_select %p201, %s18, 1
      %p203 = scmp.lt.s32.totalorder %s200, 1
      %s204 = scalar_select %p203, %s200, 1
      %s205 = smul.addr %s202, 4
      %s206 = sadd.s32 %s204, %s205
      %s207 = smul.addr %s206, 8
      %s208 = scalar_lea.vmem %s3, %s207
      %s209 = smul.u32 2, %s19
      %v211 = vld [vmem:[%s0] sm:$0xf]
      %v212 = vld [vmem:[%s0 + $0x4] sm:$0xf]
      %v213 = vld [vmem:[%s198] sm:$0xff]
      %v214 = vld [vmem:[%s198 + $0x8] sm:$0xff]
      %v215 = vld [vmem:[%s198 + $0x10] sm:$0xff]
      %v216 = vld [vmem:[%s198 + $0x18] sm:$0xff]
      %v217 = vld [vmem:[%s198 + $0x20] sm:$0xff]
      %v218 = vld [vmem:[%s198 + $0x28] sm:$0xff]
      %v219 = vld [vmem:[%s198 + $0x30] sm:$0xff]
      %v220 = vld [vmem:[%s198 + $0x38] sm:$0xff]
      %v221 = vld [vmem:[%s198 + $0x40] sm:$0xff]
      %v222 = vld [vmem:[%s198 + $0x48] sm:$0xff]
      %v223 = vld [vmem:[%s198 + $0x50] sm:$0xff]
      %v224 = vld [vmem:[%s198 + $0x58] sm:$0xff]
      %v225 = vld [vmem:[%s198 + $0x60] sm:$0xff]
      %v226 = vld [vmem:[%s198 + $0x68] sm:$0xff]
      %v227 = vld [vmem:[%s198 + $0x70] sm:$0xff]
      %v228 = vld [vmem:[%s198 + $0x78] sm:$0xff]
      %v229 = vld [vmem:[%s1] sm:$0xff]
      %v230 = vld [vmem:[%s1 + $0x8] sm:$0xff]
      %232 = vset.pattern.permute.xlu0 0
      %233 = vperm.xlu0 %232, %v229
      %v234 = vpop.permute.xlu0 %233
      %237 = vset.pattern.permute.xlu0 0
      %238 = vperm.xlu0 %237, %v230
      %v239 = vpop.permute.xlu0 %238
      %v243 = vunpack.c.l.b16 %v211
      %v244 = vunpack.c.l.b16 %v212
      %v245 = vpack.c.b16 %v244, %v243
      %v263 = vunpack.c.l.b16 %v213
      %v264 = vunpack.c.h.b16 %v213
      %v265 = vunpack.c.l.b16 %v214
      %v266 = vunpack.c.h.b16 %v214
      %v267 = vunpack.c.l.b16 %v215
      %v268 = vunpack.c.h.b16 %v215
      %v269 = vunpack.c.l.b16 %v216
      %v270 = vunpack.c.h.b16 %v216
      %v271 = vunpack.c.l.b16 %v217
      %v272 = vunpack.c.h.b16 %v217
      %v273 = vunpack.c.l.b16 %v218
      %v274 = vunpack.c.h.b16 %v218
      %v275 = vunpack.c.l.b16 %v219
      %v276 = vunpack.c.h.b16 %v219
      %v277 = vunpack.c.l.b16 %v220
      %v278 = vunpack.c.h.b16 %v220
      %v279 = vunpack.c.l.b16 %v221
      %v280 = vunpack.c.h.b16 %v221
      %v281 = vunpack.c.l.b16 %v222
      %v282 = vunpack.c.h.b16 %v222
      %v283 = vunpack.c.l.b16 %v223
      %v284 = vunpack.c.h.b16 %v223
      %v285 = vunpack.c.l.b16 %v224
      %v286 = vunpack.c.h.b16 %v224
      %v287 = vunpack.c.l.b16 %v225
      %v288 = vunpack.c.h.b16 %v225
      %v289 = vunpack.c.l.b16 %v226
      %v290 = vunpack.c.h.b16 %v226
      %v291 = vunpack.c.l.b16 %v227
      %v292 = vunpack.c.h.b16 %v227
      %v293 = vunpack.c.l.b16 %v228
      %v294 = vunpack.c.h.b16 %v228
      %v295 = vpack.c.b16 %v265, %v263
      %v296 = vpack.c.b16 %v266, %v264
      %v297 = vpack.c.b16 %v269, %v267
      %v298 = vpack.c.b16 %v270, %v268
      %v299 = vpack.c.b16 %v273, %v271
      %v300 = vpack.c.b16 %v274, %v272
      %v301 = vpack.c.b16 %v277, %v275
      %v302 = vpack.c.b16 %v278, %v276
      %v303 = vpack.c.b16 %v281, %v279
      %v304 = vpack.c.b16 %v282, %v280
      %v305 = vpack.c.b16 %v285, %v283
      %v306 = vpack.c.b16 %v286, %v284
      %v307 = vpack.c.b16 %v289, %v287
      %v308 = vpack.c.b16 %v290, %v288
      %v309 = vpack.c.b16 %v293, %v291
      %v310 = vpack.c.b16 %v294, %v292
      %327 = vmatprep.subr.bf16.mxu0 %v296
      %328 = vmatpush1.bf16.msra.mxu0 %v295
      %329 = vmatprep.subr.bf16.mxu0 %v298
      %330 = vmatpush1.bf16.msra.mxu0 %v297
      %331 = vmatprep.subr.bf16.mxu0 %v300
      %332 = vmatpush1.bf16.msra.mxu0 %v299
      %333 = vmatprep.subr.bf16.mxu0 %v302
      %334 = vmatpush1.bf16.msra.mxu0 %v301
      %335 = vmatprep.subr.bf16.mxu0 %v304
      %336 = vmatpush1.bf16.msra.mxu0 %v303
      %337 = vmatprep.subr.bf16.mxu0 %v306
      %338 = vmatpush1.bf16.msra.mxu0 %v305
      %339 = vmatprep.subr.bf16.mxu0 %v308
      %340 = vmatpush1.bf16.msra.mxu0 %v307
      %341 = vmatprep.subr.bf16.mxu0 %v310
      %342 = vmatpush1.bf16.msra.mxu0 %v309
      %343 = vmatprep.subr.bf16.mxu0 0
      %344 = vmatpush1.bf16.msra.mxu0 0
      %345 = vmatprep.subr.bf16.mxu0 0
      %346 = vmatpush1.bf16.msra.mxu0 0
      %347 = vmatprep.subr.bf16.mxu0 0
      %348 = vmatpush1.bf16.msra.mxu0 0
      %349 = vmatprep.subr.bf16.mxu0 0
      %350 = vmatpush1.bf16.msra.mxu0 0
      %351 = vmatprep.subr.bf16.mxu0 0
      %352 = vmatpush1.bf16.msra.mxu0 0
      %353 = vmatprep.subr.bf16.mxu0 0
      %354 = vmatpush1.bf16.msra.mxu0 0
      %355 = vmatprep.subr.bf16.mxu0 0
      %356 = vmatpush1.bf16.msra.mxu0 0
      %357 = vmatprep.subr.bf16.mxu0 0
      %358 = vmatpush1.bf16.msra.mxu0 0
      %359 = vmatprep.mubr.bf16.mxu0 0
      %360 = vmatmul.mubr.bf16.gmra.mrb[0].mxu0 %v245
      %v361 = vpop.f32.mrb[0].mxu0
      %v362 = vadd.f32 %v234, %v361
      %v363 = vpop.f32.mrb[0].mxu0
      %v364 = vadd.f32 %v234, %v363
      %v365 = vpop.f32.mrb[0].mxu0
      %v366 = vadd.f32 %v239, %v365
      %v367 = vpop.f32.mrb[0].mxu0
      %v368 = vadd.f32 %v239, %v367
      %369 = vdwg.mxu0
      %v370 = vmax.f32 %v362, 0.0
      %v371 = vmax.f32 %v364, 0.0
      %v372 = vmax.f32 %v366, 0.0
      %v373 = vmax.f32 %v368, 0.0
      %374 = vst [vmem:[%s208] sm:$0xff] %v370
      %375 = vst [vmem:[%s208 + $0x8] sm:$0xff] %v371
      %376 = vst [vmem:[%s208 + $0x10] sm:$0xff] %v372
      %377 = vst [vmem:[%s208 + $0x18] sm:$0xff] %v373
      %s378 = smul.u32 2, %s19
      %p379 = scmp.lt.s32.totalorder %s18, 1
      %s380 = scalar_select %p379, %s18, 1
      %p381 = scmp.lt.s32.totalorder %s378, 1
      %s382 = scalar_select %p381, %s378, 1
      %s383 = smul.addr %s380, 4
      %s384 = sadd.s32 %s382, %s383
      %s385 = smul.addr %s384, 8
      %s386 = scalar_lea.vmem %s3, %s385
      // Predicated region
      $region33: #{deform_conv_relu2d.1} parent=31 // pred_check
        %p387 = pneg %p116
      $region34: #{deform_conv_relu2d.1} parent=31 // pred_check_branch
        %389 = sbr.rel (%p387) target = $region36
      $region35: #{deform_conv_relu2d.1} parent=31 // pred_region
        %s390 = smul.u32 2, %s19
      $region36: #{deform_conv_relu2d.1} parent=31 // pred_fallthru
        _
    $region32: #{deform_conv_relu2d.1} parent=5 // pred_fallthru
      _
    %p391 = scmp.le.s32.totalorder 2, %s9
    // Predicated region
    $region37: #{deform_conv_relu2d.1} parent=5 // pred_check
      %p392 = pneg %p391
    $region38: #{deform_conv_relu2d.1} parent=5 // pred_check_branch
      %394 = sbr.rel (%p392) target = $region40
    $region39: #{deform_conv_relu2d.1} parent=5 // pred_region
      %s395 = ssub.s32 %s9, 2
      // Predicated region
      $region41: #{deform_conv_relu2d.1} parent=39 // pred_check
        %p396 = pneg %p122
      $region42: #{deform_conv_relu2d.1} parent=39 // pred_check_branch
        %398 = sbr.rel (%p396) target = $region44
      $region43: #{deform_conv_relu2d.1} parent=39 // pred_region
        %s399 = smul.u32 2, %s21
        %p400 = scmp.lt.s32.totalorder %s20, 1
        %s401 = scalar_select %p400, %s20, 1
        %p402 = scmp.lt.s32.totalorder %s399, 1
        %s403 = scalar_select %p402, %s399, 1
        %s404 = smul.addr %s401, 4
        %s405 = sadd.s32 %s403, %s404
        %s406 = smul.addr %s405, 8
        %s407 = scalar_lea.vmem %s3, %s406
      $region44: #{deform_conv_relu2d.1} parent=39 // pred_fallthru
        _
    $region40: #{deform_conv_relu2d.1} parent=5 // pred_fallthru
      _
  $region6: #{deform_conv_relu2d.1} parent=0 // loop_footer
    %s13 = sadd.s32 1, %s9
  $region7: #{deform_conv_relu2d.1} parent=0 // loop_footer_branch
    %8 = sbr.rel target = $region3
  $region8: #{deform_conv_relu2d.1} parent=0 // loop_exit
    _

</llo_original>
